<compile_context>
chip_gen: v5e
topology: v5e:2x2
jax: 0.10.0
libtpu: 0.0.40
codegen_flags: <defaults>
</compile_context>

<pallas_src>
import functools

import jax
import jax.numpy as jnp
from jax.experimental import pallas as pl
from jax.experimental.pallas import tpu as pltpu


# ----------------------------- kernels ------------------------------------ #

def _hdc_copy_kernel(x_ref, o_ref, *, rx, ry):
    """Matmul-free path (ry == 1 or integer dtypes). Exact for every dtype."""
    cb = x_ref.shape[1]
    w = x_ref.shape[3]
    th_out = o_ref.shape[2]
    out_w = o_ref.shape[3]

    x = x_ref[...].reshape(cb, th_out, rx, w)
    for c in range(cb):
        for sx in range(rx):
            rows = x[c, :, sx, :]                        # (th_out, W), 0 FLOP
            if ry == 1:
                o_ref[0, c * rx + sx, :, :] = rows
            else:
                r = rows.reshape(th_out, out_w, ry)      # lane deinterleave
                for sy in range(ry):
                    o_ref[0, (c * rx + sx) * ry + sy, :, :] = r[:, :, sy]


def _hdc_mxu_kernel(x_ref, q_ref, o_ref, *, rx, ry, wb, precision):
    """One-hot MXU lane gather, blocked along W, fused over the ry phases."""
    cb = x_ref.shape[1]
    w = x_ref.shape[3]
    th_out = o_ref.shape[2]
    owb = wb // ry
    nblk = w // wb

    q = q_ref[...]                                       # (wb, wb), resident
    x = x_ref[...].reshape(cb, th_out, rx, w)
    for sx in range(rx):
        # Row (sublane) decimation: static index on a reshaped value.
        rows = x[:, :, sx, :].reshape(cb * th_out, w)
        for j in range(nblk):
            blk = rows[:, j * wb:(j + 1) * wb]
            # One fused MXU gather covers all ry sub-pixel phases of this
            # column block; result lanes are grouped [sy * owb + ow].
            y = jnp.dot(blk, q,
                        preferred_element_type=o_ref.dtype,
                        precision=precision)
            y = y.reshape(cb, th_out, wb)
            for c in range(cb):
                for sy in range(ry):
                    o_ref[0, (c * rx + sx) * ry + sy, :,
                          j * owb:(j + 1) * owb] = y[c, :, sy * owb:(sy + 1) * owb]


# --------------------------- host-side helpers ----------------------------- #

_IN_BLOCK_BUDGET = 3 << 20   # per-step input-slab budget (bytes)


def _make_q(wb, ry, dtype):
    """Fused one-hot lane-gather matrix: q[w, sy*owb + ow] = (w == ow*ry + sy)."""
    owb = wb // ry
    col = jnp.arange(wb)
    src = (col % owb) * ry + (col // owb)
    return (jnp.arange(wb)[:, None] == src[None, :]).astype(dtype)


def _pick_row_tile(H, W, rx, itemsize, budget):
    if H * W * itemsize <= budget:
        return H
    unit = 8 * rx
    if H % unit != 0:
        return H                       # cannot tile cleanly; keep full frame
    max_th = max((budget // (W * itemsize)) // unit * unit, unit)
    th = min(max_th, H)
    th = (th // unit) * unit
    while th >= unit:
        if H % th == 0:
            return th
        th -= unit
    return H


def _pick_channel_block(C, per_ch_bytes, budget, rx, ry):
    cap = min(C,
              max(budget // max(per_ch_bytes, 1), 1),
              max(64 // (rx * ry), 1),
              16)
    for cb in range(int(cap), 0, -1):
        if C % cb == 0:
            return cb
    return 1


def _pick_wb(W, ry):
    unit = 128 * ry                    # keeps per-phase output slices lane-dense
    cap = max(256, unit)               # ~MXU-sized column tile
    wb = (cap // unit) * unit
    while wb >= unit:
        if W % wb == 0:
            return wb
        wb -= unit
    for wb in range(min(W, cap), 0, -1):
        if W % wb == 0 and wb % ry == 0:
            return wb
    return W


def _ensure_two_steps(B, C, CB, H, TH, rx):
    """v7x has two TensorCores: make sure the parallel grid has >= 2 steps."""
    if B * (C // CB) * (H // TH) >= 2:
        return CB, TH
    if CB > 1:
        for cb in range(CB // 2, 0, -1):
            if C % cb == 0:
                return cb, TH
    unit = 8 * rx
    if TH == H and H % unit == 0 and H // unit >= 2:
        for th in range((H // 2) // unit * unit, unit - 1, -unit):
            if th > 0 and H % th == 0:
                return CB, th
    return CB, TH


# ------------------------------- wrapper ----------------------------------- #

def hdc(x, downscale_factor):
    """HDC forward: reverse 2D pixel shuffle (space-to-depth)."""
    if isinstance(downscale_factor, int):
        rx = ry = downscale_factor
    elif isinstance(downscale_factor, (tuple, list)):
        rx, ry = int(downscale_factor[0]), int(downscale_factor[1])
    else:
        raise ValueError("scale factor should be int or tuple or list")

    B, C, H, W = x.shape
    if H % rx != 0 or W % ry != 0:
        raise ValueError(
            f"spatial dims ({H}, {W}) must be divisible by scale ({rx}, {ry})")
    out_h, out_w = H // rx, W // ry
    out_c = C * rx * ry
    itemsize = jnp.dtype(x.dtype).itemsize

    # ---- tiling / channel folding ----
    per_ch_bytes = H * W * itemsize
    if per_ch_bytes <= _IN_BLOCK_BUDGET:
        TH = H
        CB = _pick_channel_block(C, per_ch_bytes, _IN_BLOCK_BUDGET, rx, ry)
    else:
        CB = 1
        TH = _pick_row_tile(H, W, rx, itemsize, _IN_BLOCK_BUDGET)
    CB, TH = _ensure_two_steps(B, C, CB, H, TH, rx)
    n_row_tiles = H // TH
    th_out = TH // rx

    # ---- lane-gather path selection ----
    use_mxu = ry > 1 and jnp.issubdtype(x.dtype, jnp.floating)
    wb = _pick_wb(W, ry) if use_mxu else W
    # f32 needs >= bf16x3 MXU passes for the one-hot gather to stay bit-exact;
    # bf16/f16 accumulate in f32 natively and are exact with DEFAULT.
    precision = (jax.lax.Precision.HIGHEST if x.dtype == jnp.float32
                 else jax.lax.Precision.DEFAULT)

    # ---- VMEM accounting: 2x double-buffered in + 2x out + Q + margin ----
    block_in_bytes = CB * TH * W * itemsize
    q_bytes = wb * wb * itemsize if use_mxu else 0
    vmem_limit = 4 * block_in_bytes + 2 * q_bytes + (4 << 20)
    vmem_limit = int(min(max(vmem_limit, 16 << 20), 48 << 20))

    in_specs = [pl.BlockSpec((1, CB, TH, W), lambda b, c, t: (b, c, t, 0))]
    operands = [x]
    if use_mxu:
        # Constant index_map: Q is DMA'd once and stays resident in VMEM.
        in_specs.append(pl.BlockSpec((wb, wb), lambda b, c, t: (0, 0)))
        operands.append(_make_q(wb, ry, x.dtype))
        kernel = functools.partial(_hdc_mxu_kernel, rx=rx, ry=ry, wb=wb,
                                   precision=precision)
        flops = 2 * B * C * H * W * wb
    else:
        kernel = functools.partial(_hdc_copy_kernel, rx=rx, ry=ry)
        flops = 0

    return pl.pallas_call(
        kernel,
        out_shape=jax.ShapeDtypeStruct((B, out_c, out_h, out_w), x.dtype),
        grid_spec=pltpu.PrefetchScalarGridSpec(
            num_scalar_prefetch=0,
            grid=(B, C // CB, n_row_tiles),
            in_specs=in_specs,
            out_specs=pl.BlockSpec(
                (1, CB * rx * ry, th_out, out_w),
                lambda b, c, t: (b, c, t, 0)),
        ),
        compiler_params=pltpu.CompilerParams(
            dimension_semantics=("parallel", "parallel", "parallel"),
            vmem_limit_bytes=vmem_limit),
        cost_estimate=pl.CostEstimate(
            flops=int(flops),
            transcendentals=0,
            bytes_accessed=int(2 * B * C * H * W * itemsize)),
    )(*operands)


def hdc_ref(x, downscale_factor):
    """Pure-JAX reference mirroring PyTorch PixelShuffle2D(is_reverse=True)."""
    if isinstance(downscale_factor, int):
        rx = ry = downscale_factor
    else:
        rx, ry = downscale_factor
    B, C, H, W = x.shape
    oh, ow = H // rx, W // ry
    v = x.reshape(B, C, oh, rx, ow, ry)
    v = jnp.transpose(v, (0, 1, 3, 5, 2, 4))
    return v.reshape(B, C * rx * ry, oh, ow)


if __name__ == "__main__":
    key = jax.random.PRNGKey(0)
    B, C, H, W = 2, 4, 16, 16
    r = 2
    x = jax.random.normal(key, (B, C, H, W), dtype=jnp.float32)

    out = jax.block_until_ready(hdc(x, r))

    ref = hdc_ref(x, r)
    assert out.shape == (B, C * r * r, H // r, W // r), out.shape
    assert jnp.array_equal(out, ref), "mismatch vs reference"

    print("KERNEL_OK")
</pallas_src>

<mosaic_0001>
module attributes {stable_mosaic.version = 11 : i64} {
  func.func @_hdc_mxu_kernel(%arg0: i32, %arg1: i32, %arg2: i32, %arg3: memref<1x4x16x16xf32, #tpu.memory_space<vmem>>, %arg4: memref<16x16xf32, #tpu.memory_space<vmem>>, %arg5: memref<1x16x8x8xf32, #tpu.memory_space<vmem>>) attributes {dimension_semantics = [#tpu.dimension_semantics<parallel>, #tpu.dimension_semantics<parallel>, #tpu.dimension_semantics<parallel>], iteration_bounds = array<i64: 2, 1, 1>, scalar_prefetch = 0 : i64, scratch_operands = 0 : i64, tpu.core_type = #tpu.core_type<tc>, window_params = [{transform_indices = @transform_0, window_bounds = array<i64: 1, 4, 16, 16>}, {pipeline_mode = #tpu.pipeline_mode<synchronous>, transform_indices = @transform_1, window_bounds = array<i64: 16, 16>}, {transform_indices = @transform_2, window_bounds = array<i64: 1, 16, 8, 8>}]} {
    %c0 = arith.constant 0 : index
    %c0_0 = arith.constant 0 : index
    %0 = vector.load %arg4[%c0, %c0_0] : memref<16x16xf32, #tpu.memory_space<vmem>>, vector<16x16xf32>
    %c0_1 = arith.constant 0 : index
    %c0_2 = arith.constant 0 : index
    %c0_3 = arith.constant 0 : index
    %c0_4 = arith.constant 0 : index
    %1 = vector.load %arg3[%c0_1, %c0_2, %c0_3, %c0_4] : memref<1x4x16x16xf32, #tpu.memory_space<vmem>>, vector<1x4x16x16xf32>
    %2 = vector.shape_cast %1 : vector<1x4x16x16xf32> to vector<4x8x2x16xf32>
    %3 = vector.extract_strided_slice %2 {offsets = [0, 0, 0, 0], sizes = [4, 8, 1, 16], strides = [1, 1, 1, 1]} : vector<4x8x2x16xf32> to vector<4x8x1x16xf32>
    %4 = vector.shape_cast %3 : vector<4x8x1x16xf32> to vector<4x8x16xf32>
    %5 = vector.shape_cast %4 : vector<4x8x16xf32> to vector<32x16xf32>
    %cst = arith.constant dense<0.000000e+00> : vector<32x16xf32>
    %6 = tpu.matmul %5, %0, %cst {dimension_numbers = #tpu.dot_dimension_numbers<[1], [0], [0], [1], [0, 0, 1, 1], [], []>, precision = #tpu.contract_precision<fp32>} : vector<32x16xf32>, vector<16x16xf32>, vector<32x16xf32> -> vector<32x16xf32>
    %7 = vector.shape_cast %6 : vector<32x16xf32> to vector<4x8x16xf32>
    %8 = vector.extract_strided_slice %7 {offsets = [0, 0, 0], sizes = [1, 8, 8], strides = [1, 1, 1]} : vector<4x8x16xf32> to vector<1x8x8xf32>
    %9 = vector.shape_cast %8 : vector<1x8x8xf32> to vector<8x8xf32>
    %c0_5 = arith.constant 0 : index
    %c0_6 = arith.constant 0 : index
    %c0_7 = arith.constant 0 : index
    %c0_8 = arith.constant 0 : index
    %10 = vector.load %arg5[%c0_5, %c0_6, %c0_7, %c0_8] : memref<1x16x8x8xf32, #tpu.memory_space<vmem>>, vector<1x1x8x8xf32>
    %11 = vector.shape_cast %10 : vector<1x1x8x8xf32> to vector<8x8xf32>
    %12 = vector.shape_cast %9 : vector<8x8xf32> to vector<1x1x8x8xf32>
    tpu.vector_store %arg5[%c0_5, %c0_6, %c0_7, %c0_8], %12 {strides = array<i32>} : memref<1x16x8x8xf32, #tpu.memory_space<vmem>>, vector<1x1x8x8xf32>,
    %13 = vector.extract_strided_slice %7 {offsets = [0, 0, 8], sizes = [1, 8, 8], strides = [1, 1, 1]} : vector<4x8x16xf32> to vector<1x8x8xf32>
    %14 = vector.shape_cast %13 : vector<1x8x8xf32> to vector<8x8xf32>
    %c0_9 = arith.constant 0 : index
    %c1 = arith.constant 1 : index
    %c0_10 = arith.constant 0 : index
    %c0_11 = arith.constant 0 : index
    %15 = vector.load %arg5[%c0_9, %c1, %c0_10, %c0_11] : memref<1x16x8x8xf32, #tpu.memory_space<vmem>>, vector<1x1x8x8xf32>
    %16 = vector.shape_cast %15 : vector<1x1x8x8xf32> to vector<8x8xf32>
    %17 = vector.shape_cast %14 : vector<8x8xf32> to vector<1x1x8x8xf32>
    tpu.vector_store %arg5[%c0_9, %c1, %c0_10, %c0_11], %17 {strides = array<i32>} : memref<1x16x8x8xf32, #tpu.memory_space<vmem>>, vector<1x1x8x8xf32>,
    %18 = vector.extract_strided_slice %7 {offsets = [1, 0, 0], sizes = [1, 8, 8], strides = [1, 1, 1]} : vector<4x8x16xf32> to vector<1x8x8xf32>
    %19 = vector.shape_cast %18 : vector<1x8x8xf32> to vector<8x8xf32>
    %c0_12 = arith.constant 0 : index
    %c4 = arith.constant 4 : index
    %c0_13 = arith.constant 0 : index
    %c0_14 = arith.constant 0 : index
    %20 = vector.load %arg5[%c0_12, %c4, %c0_13, %c0_14] : memref<1x16x8x8xf32, #tpu.memory_space<vmem>>, vector<1x1x8x8xf32>
    %21 = vector.shape_cast %20 : vector<1x1x8x8xf32> to vector<8x8xf32>
    %22 = vector.shape_cast %19 : vector<8x8xf32> to vector<1x1x8x8xf32>
    tpu.vector_store %arg5[%c0_12, %c4, %c0_13, %c0_14], %22 {strides = array<i32>} : memref<1x16x8x8xf32, #tpu.memory_space<vmem>>, vector<1x1x8x8xf32>,
    %23 = vector.extract_strided_slice %7 {offsets = [1, 0, 8], sizes = [1, 8, 8], strides = [1, 1, 1]} : vector<4x8x16xf32> to vector<1x8x8xf32>
    %24 = vector.shape_cast %23 : vector<1x8x8xf32> to vector<8x8xf32>
    %c0_15 = arith.constant 0 : index
    %c5 = arith.constant 5 : index
    %c0_16 = arith.constant 0 : index
    %c0_17 = arith.constant 0 : index
    %25 = vector.load %arg5[%c0_15, %c5, %c0_16, %c0_17] : memref<1x16x8x8xf32, #tpu.memory_space<vmem>>, vector<1x1x8x8xf32>
    %26 = vector.shape_cast %25 : vector<1x1x8x8xf32> to vector<8x8xf32>
    %27 = vector.shape_cast %24 : vector<8x8xf32> to vector<1x1x8x8xf32>
    tpu.vector_store %arg5[%c0_15, %c5, %c0_16, %c0_17], %27 {strides = array<i32>} : memref<1x16x8x8xf32, #tpu.memory_space<vmem>>, vector<1x1x8x8xf32>,
    %28 = vector.extract_strided_slice %7 {offsets = [2, 0, 0], sizes = [1, 8, 8], strides = [1, 1, 1]} : vector<4x8x16xf32> to vector<1x8x8xf32>
    %29 = vector.shape_cast %28 : vector<1x8x8xf32> to vector<8x8xf32>
    %c0_18 = arith.constant 0 : index
    %c8 = arith.constant 8 : index
    %c0_19 = arith.constant 0 : index
    %c0_20 = arith.constant 0 : index
    %30 = vector.load %arg5[%c0_18, %c8, %c0_19, %c0_20] : memref<1x16x8x8xf32, #tpu.memory_space<vmem>>, vector<1x1x8x8xf32>
    %31 = vector.shape_cast %30 : vector<1x1x8x8xf32> to vector<8x8xf32>
    %32 = vector.shape_cast %29 : vector<8x8xf32> to vector<1x1x8x8xf32>
    tpu.vector_store %arg5[%c0_18, %c8, %c0_19, %c0_20], %32 {strides = array<i32>} : memref<1x16x8x8xf32, #tpu.memory_space<vmem>>, vector<1x1x8x8xf32>,
    %33 = vector.extract_strided_slice %7 {offsets = [2, 0, 8], sizes = [1, 8, 8], strides = [1, 1, 1]} : vector<4x8x16xf32> to vector<1x8x8xf32>
    %34 = vector.shape_cast %33 : vector<1x8x8xf32> to vector<8x8xf32>
    %c0_21 = arith.constant 0 : index
    %c9 = arith.constant 9 : index
    %c0_22 = arith.constant 0 : index
    %c0_23 = arith.constant 0 : index
    %35 = vector.load %arg5[%c0_21, %c9, %c0_22, %c0_23] : memref<1x16x8x8xf32, #tpu.memory_space<vmem>>, vector<1x1x8x8xf32>
    %36 = vector.shape_cast %35 : vector<1x1x8x8xf32> to vector<8x8xf32>
    %37 = vector.shape_cast %34 : vector<8x8xf32> to vector<1x1x8x8xf32>
    tpu.vector_store %arg5[%c0_21, %c9, %c0_22, %c0_23], %37 {strides = array<i32>} : memref<1x16x8x8xf32, #tpu.memory_space<vmem>>, vector<1x1x8x8xf32>,
    %38 = vector.extract_strided_slice %7 {offsets = [3, 0, 0], sizes = [1, 8, 8], strides = [1, 1, 1]} : vector<4x8x16xf32> to vector<1x8x8xf32>
    %39 = vector.shape_cast %38 : vector<1x8x8xf32> to vector<8x8xf32>
    %c0_24 = arith.constant 0 : index
    %c12 = arith.constant 12 : index
    %c0_25 = arith.constant 0 : index
    %c0_26 = arith.constant 0 : index
    %40 = vector.load %arg5[%c0_24, %c12, %c0_25, %c0_26] : memref<1x16x8x8xf32, #tpu.memory_space<vmem>>, vector<1x1x8x8xf32>
    %41 = vector.shape_cast %40 : vector<1x1x8x8xf32> to vector<8x8xf32>
    %42 = vector.shape_cast %39 : vector<8x8xf32> to vector<1x1x8x8xf32>
    tpu.vector_store %arg5[%c0_24, %c12, %c0_25, %c0_26], %42 {strides = array<i32>} : memref<1x16x8x8xf32, #tpu.memory_space<vmem>>, vector<1x1x8x8xf32>,
    %43 = vector.extract_strided_slice %7 {offsets = [3, 0, 8], sizes = [1, 8, 8], strides = [1, 1, 1]} : vector<4x8x16xf32> to vector<1x8x8xf32>
    %44 = vector.shape_cast %43 : vector<1x8x8xf32> to vector<8x8xf32>
    %c0_27 = arith.constant 0 : index
    %c13 = arith.constant 13 : index
    %c0_28 = arith.constant 0 : index
    %c0_29 = arith.constant 0 : index
    %45 = vector.load %arg5[%c0_27, %c13, %c0_28, %c0_29] : memref<1x16x8x8xf32, #tpu.memory_space<vmem>>, vector<1x1x8x8xf32>
    %46 = vector.shape_cast %45 : vector<1x1x8x8xf32> to vector<8x8xf32>
    %47 = vector.shape_cast %44 : vector<8x8xf32> to vector<1x1x8x8xf32>
    tpu.vector_store %arg5[%c0_27, %c13, %c0_28, %c0_29], %47 {strides = array<i32>} : memref<1x16x8x8xf32, #tpu.memory_space<vmem>>, vector<1x1x8x8xf32>,
    %48 = vector.extract_strided_slice %2 {offsets = [0, 0, 1, 0], sizes = [4, 8, 1, 16], strides = [1, 1, 1, 1]} : vector<4x8x2x16xf32> to vector<4x8x1x16xf32>
    %49 = vector.shape_cast %48 : vector<4x8x1x16xf32> to vector<4x8x16xf32>
    %50 = vector.shape_cast %49 : vector<4x8x16xf32> to vector<32x16xf32>
    %cst_30 = arith.constant dense<0.000000e+00> : vector<32x16xf32>
    %51 = tpu.matmul %50, %0, %cst_30 {dimension_numbers = #tpu.dot_dimension_numbers<[1], [0], [0], [1], [0, 0, 1, 1], [], []>, precision = #tpu.contract_precision<fp32>} : vector<32x16xf32>, vector<16x16xf32>, vector<32x16xf32> -> vector<32x16xf32>
    %52 = vector.shape_cast %51 : vector<32x16xf32> to vector<4x8x16xf32>
    %53 = vector.extract_strided_slice %52 {offsets = [0, 0, 0], sizes = [1, 8, 8], strides = [1, 1, 1]} : vector<4x8x16xf32> to vector<1x8x8xf32>
    %54 = vector.shape_cast %53 : vector<1x8x8xf32> to vector<8x8xf32>
    %c0_31 = arith.constant 0 : index
    %c2 = arith.constant 2 : index
    %c0_32 = arith.constant 0 : index
    %c0_33 = arith.constant 0 : index
    %55 = vector.load %arg5[%c0_31, %c2, %c0_32, %c0_33] : memref<1x16x8x8xf32, #tpu.memory_space<vmem>>, vector<1x1x8x8xf32>
    %56 = vector.shape_cast %55 : vector<1x1x8x8xf32> to vector<8x8xf32>
    %57 = vector.shape_cast %54 : vector<8x8xf32> to vector<1x1x8x8xf32>
    tpu.vector_store %arg5[%c0_31, %c2, %c0_32, %c0_33], %57 {strides = array<i32>} : memref<1x16x8x8xf32, #tpu.memory_space<vmem>>, vector<1x1x8x8xf32>,
    %58 = vector.extract_strided_slice %52 {offsets = [0, 0, 8], sizes = [1, 8, 8], strides = [1, 1, 1]} : vector<4x8x16xf32> to vector<1x8x8xf32>
    %59 = vector.shape_cast %58 : vector<1x8x8xf32> to vector<8x8xf32>
    %c0_34 = arith.constant 0 : index
    %c3 = arith.constant 3 : index
    %c0_35 = arith.constant 0 : index
    %c0_36 = arith.constant 0 : index
    %60 = vector.load %arg5[%c0_34, %c3, %c0_35, %c0_36] : memref<1x16x8x8xf32, #tpu.memory_space<vmem>>, vector<1x1x8x8xf32>
    %61 = vector.shape_cast %60 : vector<1x1x8x8xf32> to vector<8x8xf32>
    %62 = vector.shape_cast %59 : vector<8x8xf32> to vector<1x1x8x8xf32>
    tpu.vector_store %arg5[%c0_34, %c3, %c0_35, %c0_36], %62 {strides = array<i32>} : memref<1x16x8x8xf32, #tpu.memory_space<vmem>>, vector<1x1x8x8xf32>,
    %63 = vector.extract_strided_slice %52 {offsets = [1, 0, 0], sizes = [1, 8, 8], strides = [1, 1, 1]} : vector<4x8x16xf32> to vector<1x8x8xf32>
    %64 = vector.shape_cast %63 : vector<1x8x8xf32> to vector<8x8xf32>
    %c0_37 = arith.constant 0 : index
    %c6 = arith.constant 6 : index
    %c0_38 = arith.constant 0 : index
    %c0_39 = arith.constant 0 : index
    %65 = vector.load %arg5[%c0_37, %c6, %c0_38, %c0_39] : memref<1x16x8x8xf32, #tpu.memory_space<vmem>>, vector<1x1x8x8xf32>
    %66 = vector.shape_cast %65 : vector<1x1x8x8xf32> to vector<8x8xf32>
    %67 = vector.shape_cast %64 : vector<8x8xf32> to vector<1x1x8x8xf32>
    tpu.vector_store %arg5[%c0_37, %c6, %c0_38, %c0_39], %67 {strides = array<i32>} : memref<1x16x8x8xf32, #tpu.memory_space<vmem>>, vector<1x1x8x8xf32>,
    %68 = vector.extract_strided_slice %52 {offsets = [1, 0, 8], sizes = [1, 8, 8], strides = [1, 1, 1]} : vector<4x8x16xf32> to vector<1x8x8xf32>
    %69 = vector.shape_cast %68 : vector<1x8x8xf32> to vector<8x8xf32>
    %c0_40 = arith.constant 0 : index
    %c7 = arith.constant 7 : index
    %c0_41 = arith.constant 0 : index
    %c0_42 = arith.constant 0 : index
    %70 = vector.load %arg5[%c0_40, %c7, %c0_41, %c0_42] : memref<1x16x8x8xf32, #tpu.memory_space<vmem>>, vector<1x1x8x8xf32>
    %71 = vector.shape_cast %70 : vector<1x1x8x8xf32> to vector<8x8xf32>
    %72 = vector.shape_cast %69 : vector<8x8xf32> to vector<1x1x8x8xf32>
    tpu.vector_store %arg5[%c0_40, %c7, %c0_41, %c0_42], %72 {strides = array<i32>} : memref<1x16x8x8xf32, #tpu.memory_space<vmem>>, vector<1x1x8x8xf32>,
    %73 = vector.extract_strided_slice %52 {offsets = [2, 0, 0], sizes = [1, 8, 8], strides = [1, 1, 1]} : vector<4x8x16xf32> to vector<1x8x8xf32>
    %74 = vector.shape_cast %73 : vector<1x8x8xf32> to vector<8x8xf32>
    %c0_43 = arith.constant 0 : index
    %c10 = arith.constant 10 : index
    %c0_44 = arith.constant 0 : index
    %c0_45 = arith.constant 0 : index
    %75 = vector.load %arg5[%c0_43, %c10, %c0_44, %c0_45] : memref<1x16x8x8xf32, #tpu.memory_space<vmem>>, vector<1x1x8x8xf32>
    %76 = vector.shape_cast %75 : vector<1x1x8x8xf32> to vector<8x8xf32>
    %77 = vector.shape_cast %74 : vector<8x8xf32> to vector<1x1x8x8xf32>
    tpu.vector_store %arg5[%c0_43, %c10, %c0_44, %c0_45], %77 {strides = array<i32>} : memref<1x16x8x8xf32, #tpu.memory_space<vmem>>, vector<1x1x8x8xf32>,
    %78 = vector.extract_strided_slice %52 {offsets = [2, 0, 8], sizes = [1, 8, 8], strides = [1, 1, 1]} : vector<4x8x16xf32> to vector<1x8x8xf32>
    %79 = vector.shape_cast %78 : vector<1x8x8xf32> to vector<8x8xf32>
    %c0_46 = arith.constant 0 : index
    %c11 = arith.constant 11 : index
    %c0_47 = arith.constant 0 : index
    %c0_48 = arith.constant 0 : index
    %80 = vector.load %arg5[%c0_46, %c11, %c0_47, %c0_48] : memref<1x16x8x8xf32, #tpu.memory_space<vmem>>, vector<1x1x8x8xf32>
    %81 = vector.shape_cast %80 : vector<1x1x8x8xf32> to vector<8x8xf32>
    %82 = vector.shape_cast %79 : vector<8x8xf32> to vector<1x1x8x8xf32>
    tpu.vector_store %arg5[%c0_46, %c11, %c0_47, %c0_48], %82 {strides = array<i32>} : memref<1x16x8x8xf32, #tpu.memory_space<vmem>>, vector<1x1x8x8xf32>,
    %83 = vector.extract_strided_slice %52 {offsets = [3, 0, 0], sizes = [1, 8, 8], strides = [1, 1, 1]} : vector<4x8x16xf32> to vector<1x8x8xf32>
    %84 = vector.shape_cast %83 : vector<1x8x8xf32> to vector<8x8xf32>
    %c0_49 = arith.constant 0 : index
    %c14 = arith.constant 14 : index
    %c0_50 = arith.constant 0 : index
    %c0_51 = arith.constant 0 : index
    %85 = vector.load %arg5[%c0_49, %c14, %c0_50, %c0_51] : memref<1x16x8x8xf32, #tpu.memory_space<vmem>>, vector<1x1x8x8xf32>
    %86 = vector.shape_cast %85 : vector<1x1x8x8xf32> to vector<8x8xf32>
    %87 = vector.shape_cast %84 : vector<8x8xf32> to vector<1x1x8x8xf32>
    tpu.vector_store %arg5[%c0_49, %c14, %c0_50, %c0_51], %87 {strides = array<i32>} : memref<1x16x8x8xf32, #tpu.memory_space<vmem>>, vector<1x1x8x8xf32>,
    %88 = vector.extract_strided_slice %52 {offsets = [3, 0, 8], sizes = [1, 8, 8], strides = [1, 1, 1]} : vector<4x8x16xf32> to vector<1x8x8xf32>
    %89 = vector.shape_cast %88 : vector<1x8x8xf32> to vector<8x8xf32>
    %c0_52 = arith.constant 0 : index
    %c15 = arith.constant 15 : index
    %c0_53 = arith.constant 0 : index
    %c0_54 = arith.constant 0 : index
    %90 = vector.load %arg5[%c0_52, %c15, %c0_53, %c0_54] : memref<1x16x8x8xf32, #tpu.memory_space<vmem>>, vector<1x1x8x8xf32>
    %91 = vector.shape_cast %90 : vector<1x1x8x8xf32> to vector<8x8xf32>
    %92 = vector.shape_cast %89 : vector<8x8xf32> to vector<1x1x8x8xf32>
    tpu.vector_store %arg5[%c0_52, %c15, %c0_53, %c0_54], %92 {strides = array<i32>} : memref<1x16x8x8xf32, #tpu.memory_space<vmem>>, vector<1x1x8x8xf32>,
    return
  }
  func.func @transform_0(%arg0: i32, %arg1: i32, %arg2: i32) -> (i32, i32, i32, i32) {
    %c0_i32 = arith.constant 0 : i32
    %c0_i32_0 = arith.constant 0 : i32
    return %arg0, %arg1, %arg2, %c0_i32 : i32, i32, i32, i32
  }
  func.func @transform_1(%arg0: i32, %arg1: i32, %arg2: i32) -> (i32, i32) {
    %c0_i32 = arith.constant 0 : i32
    %c0_i32_0 = arith.constant 0 : i32
    %c0_i32_1 = arith.constant 0 : i32
    return %c0_i32, %c0_i32_0 : i32, i32
  }
  func.func @transform_2(%arg0: i32, %arg1: i32, %arg2: i32) -> (i32, i32, i32, i32) {
    %c0_i32 = arith.constant 0 : i32
    %c0_i32_0 = arith.constant 0 : i32
    return %arg0, %arg1, %arg2, %c0_i32 : i32, i32, i32, i32
  }
}

</mosaic_0001>

<llo_original>
// kernel: tpu_custom_call.1
$region0: #{tpu_custom_call.1}
  #allocation0 [shape = 'u32[]', space=smem, size = 0x4, offset = 0x4, fixed_abs, tag = 'smem constant byte address 0x4 - core index']
  #allocation1 [shape = 'u32[72,128]{1,0:T(1,128)}', space=vmem, size = 0x9000, scoped, tag = 'internal scratch']
  %s0 = inlined_call_operand.hbm [shape: f32[2,4,16,16], index: 0, kind: input, shape index: {}]
  %s1 = inlined_call_operand.hbm [shape: f32[16,16], index: 1, kind: input, shape index: {}]
  %s2 = inlined_call_operand.vmem [shape: f32[2,16,8,8], index: 2, kind: output, shape index: {}]
  %s3 = sld [smem:[#allocation0]]
  $region49: #{tpu_custom_call.1} parent=0
    _
  %s5 = ssub.s32 1, %s3
  %s6 = scalar_select 0, %s5, %s3
  $region1: #{tpu_custom_call.1} parent=0
    #allocation2 [shape = 'u8[65536]{0}', space=vmem, size = 0x10000, scoped, tag = 'input window, operand 0']
    #allocation3 [shape = 's32[2]{0}', space=sflag, size = 0x8, scoped, tag = 'scoped memory for tpu_custom_call.1']
    #allocation4 [shape = 'u8[8192]{0}', space=vmem, size = 0x2000, scoped, tag = 'input window, operand 1, single buffered']
    #allocation5 [shape = 's32[1]{0}', space=sflag, size = 0x4, scoped, tag = 'scoped memory for tpu_custom_call.1']
    %7 = vsyncpa [#allocation3], 0
    %s8 = scalar_lea.sflag [#allocation3], 1
    %9 = vsyncpa %s8, 0
    %10 = vsyncpa [#allocation5], 0
    loop: start=0, step=1, limit=4
    $region2: #{tpu_custom_call.1} parent=1 // loop_pre_header
      _
    $region3: #{tpu_custom_call.1} parent=1 // loop_header
      %s12 = sphi 0, %s16
      %p13 = scmp.ge.s32.totalorder %s12, 4
      %s19 = sphi 0, %s38
      %s20 = sphi 0, %s34
      %s21 = sphi 0, %s30
      %s22 = sphi 0, %s19
      %s23 = sphi 0, %s20
      %s24 = sphi 0, %s21
      %s25 = sphi 0, %s22
      %s26 = sphi 0, %s23
      %s27 = sphi 0, %s24
      %s45 = sphi 0, %s47
      %s48 = sphi 0, %s45
      %s49 = sphi 0, %s48
      %s65 = sphi 0, %s49
      %s69 = sphi 0, %s69
      %s71 = sphi 0, %s69
      %s72 = sphi 0, %s71
      %s86 = sphi 0, %s72
      %s96 = sphi 0, %s98
      %s99 = sphi 0, %s96
      %s100 = sphi 0, %s99
      %s116 = sphi 0, %s100
    $region4: #{tpu_custom_call.1} parent=1 // loop_header_branch
      %15 = sbr.rel (%p13) target = $region8
    $region5: #{tpu_custom_call.1} parent=1 // loop_body
      %s17 = ssub.s32 %s12, 1
      %s18 = ssub.s32 %s12, 2
      %s28 = sadd.s32 1, %s21
      %p29 = scmp.ge.s32.totalorder %s28, 1
      %s30 = scalar_select %p29, 0, %s28
      %s31 = sadd.s32 1, %s20
      %s32 = scalar_select %p29, %s31, %s20
      %p33 = scmp.ge.s32.totalorder %s32, 1
      %s34 = scalar_select %p33, 0, %s32
      %s35 = sadd.s32 1, %s19
      %s36 = scalar_select %p33, %s35, %s19
      %p37 = scmp.ge.s32.totalorder %s36, 2
      %s38 = scalar_select %p37, 0, %s36
      %s39 = ssub.s32 %s19, %s38
      %s40 = ssub.s32 %s20, %s34
      %s41 = sor.u32 %s39, %s40
      %s42 = ssub.s32 %s21, %s30
      %s43 = sor.u32 %s41, %s42
      %p44 = scmp.eq.s32.totalorder %s43, 0
      %s46 = sadd.s32 %s45, 1
      %s47 = scalar_select %p44, %s45, %s46
      %p50 = pneg %p44
      %p51 = scmp.eq.s32.totalorder %s12, 1
      %p52 = por %p50, %p51
      %p53 = scmp.ne.s32.totalorder %s45, %s48
      %p54 = scmp.eq.s32.totalorder %s12, 0
      %p55 = por %p53, %p54
      %p56 = scmp.ne.s32.totalorder %s45, %s48
      %p57 = scmp.eq.s32.totalorder %s17, 1
      %p58 = por %p56, %p57
      %p59 = scmp.ne.s32.totalorder %s48, %s49
      %p60 = scmp.eq.s32.totalorder %s17, 0
      %p61 = por %p59, %p60
      %p62 = scmp.ne.s32.totalorder %s48, %s49
      %p63 = scmp.eq.s32.totalorder %s18, 1
      %p64 = por %p62, %p63
      %p66 = scmp.ne.s32.totalorder %s49, %s65
      %p67 = scmp.eq.s32.totalorder %s18, 0
      %p68 = por %p66, %p67
      %s70 = sadd.s32 %s69, 1
      %p73 = scmp.eq.s32.totalorder %s12, 1
      %p74 = scmp.ne.s32.totalorder %s69, %s71
      %p75 = scmp.eq.s32.totalorder %s12, 0
      %p76 = por %p74, %p75
      %p77 = scmp.ne.s32.totalorder %s69, %s71
      %p78 = scmp.eq.s32.totalorder %s17, 1
      %p79 = por %p77, %p78
      %p80 = scmp.ne.s32.totalorder %s71, %s72
      %p81 = scmp.eq.s32.totalorder %s17, 0
      %p82 = por %p80, %p81
      %p83 = scmp.ne.s32.totalorder %s71, %s72
      %p84 = scmp.eq.s32.totalorder %s18, 1
      %p85 = por %p83, %p84
      %p87 = scmp.ne.s32.totalorder %s72, %s86
      %p88 = scmp.eq.s32.totalorder %s18, 0
      %p89 = por %p87, %p88
      %s90 = ssub.s32 %s19, %s38
      %s91 = ssub.s32 %s20, %s34
      %s92 = sor.u32 %s90, %s91
      %s93 = ssub.s32 %s21, %s30
      %s94 = sor.u32 %s92, %s93
      %p95 = scmp.eq.s32.totalorder %s94, 0
      %s97 = sadd.s32 %s96, 1
      %s98 = scalar_select %p95, %s96, %s97
      %p101 = pneg %p95
      %p102 = scmp.eq.s32.totalorder %s12, 1
      %p103 = por %p101, %p102
      %p104 = scmp.ne.s32.totalorder %s96, %s99
      %p105 = scmp.eq.s32.totalorder %s12, 0
      %p106 = por %p104, %p105
      %p107 = scmp.ne.s32.totalorder %s96, %s99
      %p108 = scmp.eq.s32.totalorder %s17, 1
      %p109 = por %p107, %p108
      %p110 = scmp.ne.s32.totalorder %s99, %s100
      %p111 = scmp.eq.s32.totalorder %s17, 0
      %p112 = por %p110, %p111
      %p113 = scmp.ne.s32.totalorder %s99, %s100
      %p114 = scmp.eq.s32.totalorder %s18, 1
      %p115 = por %p113, %p114
      %p117 = scmp.ne.s32.totalorder %s100, %s116
      %p118 = scmp.eq.s32.totalorder %s18, 0
      %p119 = por %p117, %p118
      %p120 = scmp.le.s32.totalorder 1, %s12
      %p121 = scmp.lt.s32.totalorder %s12, 3
      %p122 = pnand %p120, %p121
      %p123 = pneg %p122
      // Predicated region
      $region9: #{tpu_custom_call.1} parent=5 // pred_check
        _
      $region10: #{tpu_custom_call.1} parent=5 // pred_check_branch
        %125 = sbr.rel (%p122) target = $region12
      $region11: #{tpu_custom_call.1} parent=5 // pred_region
        %s126 = ssub.s32 %s12, 1
        // Predicated region
        $region13: #{tpu_custom_call.1} parent=11 // pred_check
          %p127 = pneg %p82
        $region14: #{tpu_custom_call.1} parent=11 // pred_check_branch
          %129 = sbr.rel (%p127) target = $region16
        $region15: #{tpu_custom_call.1} parent=11 // pred_region
          %131 = vsyncadd [#allocation5], 0
          %s132 = sshll.u32 %s1, 4
          %s133 = int_to_ptr.hbm [resolvable:$true] %s132
          %s134 = sshll.u32 [#allocation4], 4
          %s135 = int_to_ptr.vmem [resolvable:$true] %s134
          %140 = dma.hbm_to_vmem [thread:$0]  %s133, 256, %s135, [#allocation5], 128, 128, 8
        $region16: #{tpu_custom_call.1} parent=11 // pred_fallthru
          _
      $region12: #{tpu_custom_call.1} parent=5 // pred_fallthru
        _
      %p141 = scmp.lt.s32.totalorder %s12, 2
      // Predicated region
      $region17: #{tpu_custom_call.1} parent=5 // pred_check
        %p142 = pneg %p141
      $region18: #{tpu_custom_call.1} parent=5 // pred_check_branch
        %144 = sbr.rel (%p142) target = $region20
      $region19: #{tpu_custom_call.1} parent=5 // pred_region
        // Predicated region
        $region21: #{tpu_custom_call.1} parent=19 // pred_check
          %p145 = pneg %p55
        $region22: #{tpu_custom_call.1} parent=19 // pred_check_branch
          %147 = sbr.rel (%p145) target = $region24
        $region23: #{tpu_custom_call.1} parent=19 // pred_region
          %s148 = sand.u32 %s45, 1
          %s149 = scalar_lea.sflag [#allocation3], %s148
          %s150 = sand.u32 %s45, 1
          %s151 = smul.addr %s150, 64
          %s152 = scalar_lea.vmem [#allocation2], %s151
          %s153 = smul.u32 4, %s20
          %s154 = smul.u32 2, %s21
          %156 = vsyncadd %s149, 0
          %s157 = smul.addr %s153, 2
          %s158 = sadd.s32 %s154, %s157
          %s159 = smul.addr %s19, 8
          %s160 = sadd.s32 %s158, %s159
          %s161 = smul.addr %s160, 8
          %s162 = scalar_lea.hbm %s0, %s161
          %s163 = sshll.u32 %s162, 4
          %s164 = int_to_ptr.hbm [resolvable:$true] %s163
          %s165 = sshll.u32 %s152, 4
          %s166 = int_to_ptr.vmem [resolvable:$true] %s165
          %171 = dma.hbm_to_vmem [thread:$0]  %s164, 1024, %s166, %s149, 128, 128, 8
        $region24: #{tpu_custom_call.1} parent=19 // pred_fallthru
          _
      $region20: #{tpu_custom_call.1} parent=5 // pred_fallthru
        _
      %p172 = scmp.le.s32.totalorder 1, %s12
      %p173 = scmp.lt.s32.totalorder %s12, 3
      %p174 = pnand %p172, %p173
      %p175 = pneg %p174
      // Predicated region
      $region25: #{tpu_custom_call.1} parent=5 // pred_check
        _
      $region26: #{tpu_custom_call.1} parent=5 // pred_check_branch
        %177 = sbr.rel (%p174) target = $region28
      $region27: #{tpu_custom_call.1} parent=5 // pred_region
        %s178 = ssub.s32 %s12, 1
        %s179 = sand.u32 %s48, 1
        %s180 = scalar_lea.sflag [#allocation3], %s179
        %s181 = sand.u32 %s48, 1
        %s182 = smul.addr %s181, 64
        %s183 = scalar_lea.vmem [#allocation2], %s182
        // Predicated region
        $region29: #{tpu_custom_call.1} parent=27 // pred_check
          %p184 = pneg %p61
        $region30: #{tpu_custom_call.1} parent=27 // pred_check_branch
          %186 = sbr.rel (%p184) target = $region32
        $region31: #{tpu_custom_call.1} parent=27 // pred_region
          %188 = dma.done %s180, 1024
        $region32: #{tpu_custom_call.1} parent=27 // pred_fallthru
          _
        // Predicated region
        $region33: #{tpu_custom_call.1} parent=27 // pred_check
          %p189 = pneg %p82
        $region34: #{tpu_custom_call.1} parent=27 // pred_check_branch
          %191 = sbr.rel (%p189) target = $region36
        $region35: #{tpu_custom_call.1} parent=27 // pred_region
          %193 = dma.done [#allocation5], 256
        $region36: #{tpu_custom_call.1} parent=27 // pred_fallthru
          _
        %s194 = sand.u32 %s48, 1
        %s195 = scalar_lea.sflag [#allocation3], %s194
        %s196 = sand.u32 %s48, 1
        %s197 = smul.addr %s196, 64
        %s198 = scalar_lea.vmem [#allocation2], %s197
        %p199 = pneg %p61
        %p200 = pneg %p58
        %p201 = pneg %p82
        %p202 = pneg %p79
        %p203 = pneg %p112
        %p204 = pneg %p109
        %s205 = smul.u32 16, %s23
        %p206 = scmp.lt.s32.totalorder %s22, 1
        %s207 = scalar_select %p206, %s22, 1
        %p208 = scmp.lt.s32.totalorder %s205, 15
        %s209 = scalar_select %p208, %s205, 15
        %p210 = scmp.lt.s32.totalorder %s24, 0
        %s211 = scalar_select %p210, %s24, 0
        %s212 = sadd.s32 %s211, %s209
        %s213 = smul.addr %s207, 16
        %s214 = sadd.s32 %s212, %s213
        %s215 = smul.addr %s214, 8
        %s216 = scalar_lea.vmem %s2, %s215
        %s217 = smul.u32 4, %s23
        %s218 = smul.u32 2, %s24
        %s219 = smul.u32 16, %s23
        %p220 = scmp.lt.s32.totalorder %s22, 1
        %s221 = scalar_select %p220, %s22, 1
        %p222 = scmp.lt.s32.totalorder %s219, 15
        %s223 = scalar_select %p222, %s219, 15
        %p224 = scmp.lt.s32.totalorder %s24, 0
        %s225 = scalar_select %p224, %s24, 0
        %s226 = sadd.s32 %s225, %s223
        %s227 = smul.addr %s221, 16
        %s228 = sadd.s32 %s226, %s227
        %s229 = smul.addr %s228, 8
        %s230 = scalar_lea.vmem %s2, %s229
        %s231 = smul.u32 16, %s23
        %v232 = vld [vmem:[#allocation4] sm:$0xff]
        %v233 = vld [vmem:[#allocation4 + $0x8] sm:$0xff]
        %v234 = vld [vmem:[%s183] sm:$0xff]
        %v235 = vld [vmem:[%s183 + $0x8] sm:$0xff]
        %v236 = vld [vmem:[%s183 + $0x10] sm:$0xff]
        %v237 = vld [vmem:[%s183 + $0x18] sm:$0xff]
        %v238 = vld [vmem:[%s183 + $0x20] sm:$0xff]
        %v239 = vld [vmem:[%s183 + $0x28] sm:$0xff]
        %v240 = vld [vmem:[%s183 + $0x30] sm:$0xff]
        %v241 = vld [vmem:[%s183 + $0x38] sm:$0xff]
        %v250 = vrot.slane %v234, 2
        %v251 = vrot.slane %v234, 4
        %v252 = vrot.slane %v234, 6
        %v253 = vrot.slane %v235, 2
        %v254 = vrot.slane %v235, 4
        %v255 = vrot.slane %v235, 6
        %v256 = vrot.slane %v236, 2
        %v257 = vrot.slane %v236, 4
        %v258 = vrot.slane %v236, 6
        %v259 = vrot.slane %v237, 2
        %v260 = vrot.slane %v237, 4
        %v261 = vrot.slane %v237, 6
        %v262 = vrot.slane %v238, 2
        %v263 = vrot.slane %v238, 4
        %v264 = vrot.slane %v238, 6
        %v265 = vrot.slane %v239, 2
        %v266 = vrot.slane %v239, 4
        %v267 = vrot.slane %v239, 6
        %v268 = vrot.slane %v240, 2
        %v269 = vrot.slane %v240, 4
        %v270 = vrot.slane %v240, 6
        %v271 = vrot.slane %v241, 2
        %v272 = vrot.slane %v241, 4
        %v273 = vrot.slane %v241, 6
        %v274 = vperm.slane %v234, 0
        %v275 = vperm.slane %v250, 0
        %v276 = vperm.slane %v251, 0
        %v277 = vperm.slane %v252, 0
        %v278 = vperm.slane %v235, 0
        %v279 = vperm.slane %v253, 0
        %v280 = vperm.slane %v254, 0
        %v281 = vperm.slane %v255, 0
        %v282 = vperm.slane %v236, 0
        %v283 = vperm.slane %v256, 0
        %v284 = vperm.slane %v257, 0
        %v285 = vperm.slane %v258, 0
        %v286 = vperm.slane %v237, 0
        %v287 = vperm.slane %v259, 0
        %v288 = vperm.slane %v260, 0
        %v289 = vperm.slane %v261, 0
        %v290 = vperm.slane %v238, 0
        %v291 = vperm.slane %v262, 0
        %v292 = vperm.slane %v263, 0
        %v293 = vperm.slane %v264, 0
        %v294 = vperm.slane %v239, 0
        %v295 = vperm.slane %v265, 0
        %v296 = vperm.slane %v266, 0
        %v297 = vperm.slane %v267, 0
        %v298 = vperm.slane %v240, 0
        %v299 = vperm.slane %v268, 0
        %v300 = vperm.slane %v269, 0
        %v301 = vperm.slane %v270, 0
        %v302 = vperm.slane %v241, 0
        %v303 = vperm.slane %v271, 0
        %v304 = vperm.slane %v272, 0
        %v305 = vperm.slane %v273, 0
        %vm306 = vcmask 1041409
        %v307 = vsel %vm306, %v275, %v274
        %vm308 = vcmask 1042434
        %v309 = vsel %vm308, %v276, %v307
        %vm310 = vcmask 1043459
        %v311 = vsel %vm310, %v277, %v309
        %vm312 = vcmask 1044484
        %v313 = vsel %vm312, %v278, %v311
        %vm314 = vcmask 1045509
        %v315 = vsel %vm314, %v279, %v313
        %vm316 = vcmask 1046534
        %v317 = vsel %vm316, %v280, %v315
        %vm318 = vcmask 1047559
        %v319 = vsel %vm318, %v281, %v317
        %v320 = vsel %vm306, %v283, %v282
        %v321 = vsel %vm308, %v284, %v320
        %v322 = vsel %vm310, %v285, %v321
        %v323 = vsel %vm312, %v286, %v322
        %v324 = vsel %vm314, %v287, %v323
        %v325 = vsel %vm316, %v288, %v324
        %v326 = vsel %vm318, %v289, %v325
        %v327 = vsel %vm306, %v291, %v290
        %v328 = vsel %vm308, %v292, %v327
        %v329 = vsel %vm310, %v293, %v328
        %v330 = vsel %vm312, %v294, %v329
        %v331 = vsel %vm314, %v295, %v330
        %v332 = vsel %vm316, %v296, %v331
        %v333 = vsel %vm318, %v297, %v332
        %v334 = vsel %vm306, %v299, %v298
        %v335 = vsel %vm308, %v300, %v334
        %v336 = vsel %vm310, %v301, %v335
        %v337 = vsel %vm312, %v302, %v336
        %v338 = vsel %vm314, %v303, %v337
        %v339 = vsel %vm316, %v304, %v338
        %v340 = vsel %vm318, %v305, %v339
        %vm341 = vcmask 130048
        %v342 = vsel %vm341, %v319, 0
        %v344 = vsel %vm341, %v326, 0
        %v346 = vsel %vm341, %v333, 0
        %v348 = vsel %vm341, %v340, 0
        %350 = vmatpush.msra.mxu0 0.0
        %351 = vmatpush.msra.mxu0 0.0
        %352 = vmatpush.msra.mxu0 0.0
        %353 = vmatpush.msra.mxu0 0.0
        %354 = vmatpush.msra.mxu0 0.0
        %355 = vmatpush.msra.mxu0 0.0
        %356 = vmatpush.msra.mxu0 0.0
        %357 = vmatpush.msra.mxu0 0.0
        %358 = vmatpush.msra.mxu0 0.0
        %359 = vmatpush.msra.mxu0 0.0
        %360 = vmatpush.msra.mxu0 0.0
        %361 = vmatpush.msra.mxu0 0.0
        %362 = vmatpush.msra.mxu0 0.0
        %363 = vmatpush.msra.mxu0 0.0
        %v364 = vand.u32 %v233, 4294901760
        %365 = vmatpush.msra.mxu0 %v364
        %v366 = vand.u32 %v232, 4294901760
        %367 = vmatpush.msra.mxu0 %v366
        %v368 = vand.u32 %v342, 4294901760
        %v369 = vsub.f32 %v342, %v368
        %v370 = vand.u32 %v369, 4294901760
        %v371 = vsub.f32 %v369, %v370
        %v372 = vand.u32 %v371, 4294901760
        %373 = vmatmul.f32.gmra.mxu0 %v372
        %v374 = vpop.f32.mrf.mxu0
        %v375 = vadd.f32 0.0, %v374
        %v376 = vand.u32 %v344, 4294901760
        %v377 = vsub.f32 %v344, %v376
        %v378 = vand.u32 %v377, 4294901760
        %v379 = vsub.f32 %v377, %v378
        %v380 = vand.u32 %v379, 4294901760
        %381 = vmatmul.f32.gmra.mxu0 %v380
        %v382 = vpop.f32.mrf.mxu0
        %v383 = vadd.f32 0.0, %v382
        %v384 = vand.u32 %v346, 4294901760
        %v385 = vsub.f32 %v346, %v384
        %v386 = vand.u32 %v385, 4294901760
        %v387 = vsub.f32 %v385, %v386
        %v388 = vand.u32 %v387, 4294901760
        %389 = vmatmul.f32.gmra.mxu0 %v388
        %v390 = vpop.f32.mrf.mxu0
        %v391 = vadd.f32 0.0, %v390
        %v392 = vand.u32 %v348, 4294901760
        %v393 = vsub.f32 %v348, %v392
        %v394 = vand.u32 %v393, 4294901760
        %v395 = vsub.f32 %v393, %v394
        %v396 = vand.u32 %v395, 4294901760
        %397 = vmatmul.f32.gmra.mxu0 %v396
        %v398 = vpop.f32.mrf.mxu0
        %v399 = vadd.f32 0.0, %v398
        %400 = vdwg.mxu0
        %401 = vmatpush.msra.mxu0 0.0
        %402 = vmatpush.msra.mxu0 0.0
        %403 = vmatpush.msra.mxu0 0.0
        %404 = vmatpush.msra.mxu0 0.0
        %405 = vmatpush.msra.mxu0 0.0
        %406 = vmatpush.msra.mxu0 0.0
        %407 = vmatpush.msra.mxu0 0.0
        %408 = vmatpush.msra.mxu0 0.0
        %409 = vmatpush.msra.mxu0 0.0
        %410 = vmatpush.msra.mxu0 0.0
        %411 = vmatpush.msra.mxu0 0.0
        %412 = vmatpush.msra.mxu0 0.0
        %413 = vmatpush.msra.mxu0 0.0
        %414 = vmatpush.msra.mxu0 0.0
        %v415 = vand.u32 %v233, 4294901760
        %v416 = vsub.f32 %v233, %v415
        %v417 = vand.u32 %v416, 4294901760
        %v418 = vsub.f32 %v416, %v417
        %v419 = vand.u32 %v418, 4294901760
        %420 = vmatpush.msra.mxu0 %v419
        %v421 = vand.u32 %v232, 4294901760
        %v422 = vsub.f32 %v232, %v421
        %v423 = vand.u32 %v422, 4294901760
        %v424 = vsub.f32 %v422, %v423
        %v425 = vand.u32 %v424, 4294901760
        %426 = vmatpush.msra.mxu0 %v425
        %v427 = vand.u32 %v342, 4294901760
        %428 = vmatmul.f32.gmra.mxu0 %v427
        %v429 = vpop.f32.mrf.mxu0
        %v430 = vadd.f32 %v375, %v429
        %v431 = vand.u32 %v344, 4294901760
        %432 = vmatmul.f32.gmra.mxu0 %v431
        %v433 = vpop.f32.mrf.mxu0
        %v434 = vadd.f32 %v383, %v433
        %v435 = vand.u32 %v346, 4294901760
        %436 = vmatmul.f32.gmra.mxu0 %v435
        %v437 = vpop.f32.mrf.mxu0
        %v438 = vadd.f32 %v391, %v437
        %v439 = vand.u32 %v348, 4294901760
        %440 = vmatmul.f32.gmra.mxu0 %v439
        %v441 = vpop.f32.mrf.mxu0
        %v442 = vadd.f32 %v399, %v441
        %443 = vdwg.mxu0
        %444 = vmatpush.msra.mxu0 0.0
        %445 = vmatpush.msra.mxu0 0.0
        %446 = vmatpush.msra.mxu0 0.0
        %447 = vmatpush.msra.mxu0 0.0
        %448 = vmatpush.msra.mxu0 0.0
        %449 = vmatpush.msra.mxu0 0.0
        %450 = vmatpush.msra.mxu0 0.0
        %451 = vmatpush.msra.mxu0 0.0
        %452 = vmatpush.msra.mxu0 0.0
        %453 = vmatpush.msra.mxu0 0.0
        %454 = vmatpush.msra.mxu0 0.0
        %455 = vmatpush.msra.mxu0 0.0
        %456 = vmatpush.msra.mxu0 0.0
        %457 = vmatpush.msra.mxu0 0.0
        %v458 = vand.u32 %v233, 4294901760
        %v459 = vsub.f32 %v233, %v458
        %460 = vmatpush.msra.mxu0 %v459
        %v461 = vand.u32 %v232, 4294901760
        %v462 = vsub.f32 %v232, %v461
        %463 = vmatpush.msra.mxu0 %v462
        %v464 = vand.u32 %v342, 4294901760
        %v465 = vsub.f32 %v342, %v464
        %466 = vmatmul.f32.gmra.mxu0 %v465
        %v467 = vpop.f32.mrf.mxu0
        %v468 = vadd.f32 %v430, %v467
        %v469 = vand.u32 %v344, 4294901760
        %v470 = vsub.f32 %v344, %v469
        %471 = vmatmul.f32.gmra.mxu0 %v470
        %v472 = vpop.f32.mrf.mxu0
        %v473 = vadd.f32 %v434, %v472
        %v474 = vand.u32 %v346, 4294901760
        %v475 = vsub.f32 %v346, %v474
        %476 = vmatmul.f32.gmra.mxu0 %v475
        %v477 = vpop.f32.mrf.mxu0
        %v478 = vadd.f32 %v438, %v477
        %v479 = vand.u32 %v348, 4294901760
        %v480 = vsub.f32 %v348, %v479
        %481 = vmatmul.f32.gmra.mxu0 %v480
        %v482 = vpop.f32.mrf.mxu0
        %v483 = vadd.f32 %v442, %v482
        %484 = vdwg.mxu0
        %485 = vmatpush.msra.mxu0 0.0
        %486 = vmatpush.msra.mxu0 0.0
        %487 = vmatpush.msra.mxu0 0.0
        %488 = vmatpush.msra.mxu0 0.0
        %489 = vmatpush.msra.mxu0 0.0
        %490 = vmatpush.msra.mxu0 0.0
        %491 = vmatpush.msra.mxu0 0.0
        %492 = vmatpush.msra.mxu0 0.0
        %493 = vmatpush.msra.mxu0 0.0
        %494 = vmatpush.msra.mxu0 0.0
        %495 = vmatpush.msra.mxu0 0.0
        %496 = vmatpush.msra.mxu0 0.0
        %497 = vmatpush.msra.mxu0 0.0
        %498 = vmatpush.msra.mxu0 0.0
        %v499 = vand.u32 %v233, 4294901760
        %500 = vmatpush.msra.mxu0 %v499
        %v501 = vand.u32 %v232, 4294901760
        %502 = vmatpush.msra.mxu0 %v501
        %v503 = vand.u32 %v342, 4294901760
        %v504 = vsub.f32 %v342, %v503
        %v505 = vand.u32 %v504, 4294901760
        %506 = vmatmul.f32.gmra.mxu0 %v505
        %v507 = vpop.f32.mrf.mxu0
        %v508 = vadd.f32 %v468, %v507
        %v509 = vand.u32 %v344, 4294901760
        %v510 = vsub.f32 %v344, %v509
        %v511 = vand.u32 %v510, 4294901760
        %512 = vmatmul.f32.gmra.mxu0 %v511
        %v513 = vpop.f32.mrf.mxu0
        %v514 = vadd.f32 %v473, %v513
        %v515 = vand.u32 %v346, 4294901760
        %v516 = vsub.f32 %v346, %v515
        %v517 = vand.u32 %v516, 4294901760
        %518 = vmatmul.f32.gmra.mxu0 %v517
        %v519 = vpop.f32.mrf.mxu0
        %v520 = vadd.f32 %v478, %v519
        %v521 = vand.u32 %v348, 4294901760
        %v522 = vsub.f32 %v348, %v521
        %v523 = vand.u32 %v522, 4294901760
        %524 = vmatmul.f32.gmra.mxu0 %v523
        %v525 = vpop.f32.mrf.mxu0
        %v526 = vadd.f32 %v483, %v525
        %527 = vdwg.mxu0
        %528 = vmatpush.msra.mxu0 0.0
        %529 = vmatpush.msra.mxu0 0.0
        %530 = vmatpush.msra.mxu0 0.0
        %531 = vmatpush.msra.mxu0 0.0
        %532 = vmatpush.msra.mxu0 0.0
        %533 = vmatpush.msra.mxu0 0.0
        %534 = vmatpush.msra.mxu0 0.0
        %535 = vmatpush.msra.mxu0 0.0
        %536 = vmatpush.msra.mxu0 0.0
        %537 = vmatpush.msra.mxu0 0.0
        %538 = vmatpush.msra.mxu0 0.0
        %539 = vmatpush.msra.mxu0 0.0
        %540 = vmatpush.msra.mxu0 0.0
        %541 = vmatpush.msra.mxu0 0.0
        %v542 = vand.u32 %v233, 4294901760
        %v543 = vsub.f32 %v233, %v542
        %v544 = vand.u32 %v543, 4294901760
        %545 = vmatpush.msra.mxu0 %v544
        %v546 = vand.u32 %v232, 4294901760
        %v547 = vsub.f32 %v232, %v546
        %v548 = vand.u32 %v547, 4294901760
        %549 = vmatpush.msra.mxu0 %v548
        %v550 = vand.u32 %v342, 4294901760
        %551 = vmatmul.f32.gmra.mxu0 %v550
        %v552 = vpop.f32.mrf.mxu0
        %v553 = vadd.f32 %v508, %v552
        %v554 = vand.u32 %v344, 4294901760
        %555 = vmatmul.f32.gmra.mxu0 %v554
        %v556 = vpop.f32.mrf.mxu0
        %v557 = vadd.f32 %v514, %v556
        %v558 = vand.u32 %v346, 4294901760
        %559 = vmatmul.f32.gmra.mxu0 %v558
        %v560 = vpop.f32.mrf.mxu0
        %v561 = vadd.f32 %v520, %v560
        %v562 = vand.u32 %v348, 4294901760
        %563 = vmatmul.f32.gmra.mxu0 %v562
        %v564 = vpop.f32.mrf.mxu0
        %v565 = vadd.f32 %v526, %v564
        %566 = vdwg.mxu0
        %567 = vmatpush.msra.mxu0 0.0
        %568 = vmatpush.msra.mxu0 0.0
        %569 = vmatpush.msra.mxu0 0.0
        %570 = vmatpush.msra.mxu0 0.0
        %571 = vmatpush.msra.mxu0 0.0
        %572 = vmatpush.msra.mxu0 0.0
        %573 = vmatpush.msra.mxu0 0.0
        %574 = vmatpush.msra.mxu0 0.0
        %575 = vmatpush.msra.mxu0 0.0
        %576 = vmatpush.msra.mxu0 0.0
        %577 = vmatpush.msra.mxu0 0.0
        %578 = vmatpush.msra.mxu0 0.0
        %579 = vmatpush.msra.mxu0 0.0
        %580 = vmatpush.msra.mxu0 0.0
        %v581 = vand.u32 %v233, 4294901760
        %582 = vmatpush.msra.mxu0 %v581
        %v583 = vand.u32 %v232, 4294901760
        %584 = vmatpush.msra.mxu0 %v583
        %v585 = vand.u32 %v342, 4294901760
        %586 = vmatmul.f32.gmra.mxu0 %v585
        %v587 = vpop.f32.mrf.mxu0
        %v588 = vadd.f32 %v553, %v587
        %v589 = vand.u32 %v344, 4294901760
        %590 = vmatmul.f32.gmra.mxu0 %v589
        %v591 = vpop.f32.mrf.mxu0
        %v592 = vadd.f32 %v557, %v591
        %v593 = vand.u32 %v346, 4294901760
        %594 = vmatmul.f32.gmra.mxu0 %v593
        %v595 = vpop.f32.mrf.mxu0
        %v596 = vadd.f32 %v561, %v595
        %v597 = vand.u32 %v348, 4294901760
        %598 = vmatmul.f32.gmra.mxu0 %v597
        %v599 = vpop.f32.mrf.mxu0
        %v600 = vadd.f32 %v565, %v599
        %601 = vdwg.mxu0
        %vm602 = vcmask 64512
        %603 = vst.msk [vmem:[%s230] sm:$0xff] %vm602, %v588
        %605 = vrot.lane.b32.xlu0 %v588, 120
        %v606 = vpop.permute.xlu0 %605
        %s608 = scalar_lea.vmem %s230, 8
        %609 = vst.msk [vmem:[%s608] sm:$0xff] %vm602, %v606
        %s610 = scalar_lea.vmem %s230, 32
        %611 = vst.msk [vmem:[%s610] sm:$0xff] %vm602, %v592
        %613 = vrot.lane.b32.xlu0 %v592, 120
        %v614 = vpop.permute.xlu0 %613
        %s616 = scalar_lea.vmem %s230, 40
        %617 = vst.msk [vmem:[%s616] sm:$0xff] %vm602, %v614
        %s618 = scalar_lea.vmem %s230, 64
        %619 = vst.msk [vmem:[%s618] sm:$0xff] %vm602, %v596
        %621 = vrot.lane.b32.xlu0 %v596, 120
        %v622 = vpop.permute.xlu0 %621
        %s624 = scalar_lea.vmem %s230, 72
        %625 = vst.msk [vmem:[%s624] sm:$0xff] %vm602, %v622
        %s626 = scalar_lea.vmem %s230, 96
        %627 = vst.msk [vmem:[%s626] sm:$0xff] %vm602, %v600
        %629 = vrot.lane.b32.xlu0 %v600, 120
        %v630 = vpop.permute.xlu0 %629
        %s632 = scalar_lea.vmem %s230, 104
        %633 = vst.msk [vmem:[%s632] sm:$0xff] %vm602, %v630
        %v634 = vperm.slane %v234, 1
        %v635 = vperm.slane %v250, 1
        %v636 = vperm.slane %v251, 1
        %v637 = vperm.slane %v252, 1
        %v638 = vperm.slane %v235, 1
        %v639 = vperm.slane %v253, 1
        %v640 = vperm.slane %v254, 1
        %v641 = vperm.slane %v255, 1
        %v642 = vperm.slane %v236, 1
        %v643 = vperm.slane %v256, 1
        %v644 = vperm.slane %v257, 1
        %v645 = vperm.slane %v258, 1
        %v646 = vperm.slane %v237, 1
        %v647 = vperm.slane %v259, 1
        %v648 = vperm.slane %v260, 1
        %v649 = vperm.slane %v261, 1
        %v650 = vperm.slane %v238, 1
        %v651 = vperm.slane %v262, 1
        %v652 = vperm.slane %v263, 1
        %v653 = vperm.slane %v264, 1
        %v654 = vperm.slane %v239, 1
        %v655 = vperm.slane %v265, 1
        %v656 = vperm.slane %v266, 1
        %v657 = vperm.slane %v267, 1
        %v658 = vperm.slane %v240, 1
        %v659 = vperm.slane %v268, 1
        %v660 = vperm.slane %v269, 1
        %v661 = vperm.slane %v270, 1
        %v662 = vperm.slane %v241, 1
        %v663 = vperm.slane %v271, 1
        %v664 = vperm.slane %v272, 1
        %v665 = vperm.slane %v273, 1
        %v666 = vsel %vm306, %v635, %v634
        %v667 = vsel %vm308, %v636, %v666
        %v668 = vsel %vm310, %v637, %v667
        %v669 = vsel %vm312, %v638, %v668
        %v670 = vsel %vm314, %v639, %v669
        %v671 = vsel %vm316, %v640, %v670
        %v672 = vsel %vm318, %v641, %v671
        %v673 = vsel %vm306, %v643, %v642
        %v674 = vsel %vm308, %v644, %v673
        %v675 = vsel %vm310, %v645, %v674
        %v676 = vsel %vm312, %v646, %v675
        %v677 = vsel %vm314, %v647, %v676
        %v678 = vsel %vm316, %v648, %v677
        %v679 = vsel %vm318, %v649, %v678
        %v680 = vsel %vm306, %v651, %v650
        %v681 = vsel %vm308, %v652, %v680
        %v682 = vsel %vm310, %v653, %v681
        %v683 = vsel %vm312, %v654, %v682
        %v684 = vsel %vm314, %v655, %v683
        %v685 = vsel %vm316, %v656, %v684
        %v686 = vsel %vm318, %v657, %v685
        %v687 = vsel %vm306, %v659, %v658
        %v688 = vsel %vm308, %v660, %v687
        %v689 = vsel %vm310, %v661, %v688
        %v690 = vsel %vm312, %v662, %v689
        %v691 = vsel %vm314, %v663, %v690
        %v692 = vsel %vm316, %v664, %v691
        %v693 = vsel %vm318, %v665, %v692
        %v694 = vsel %vm341, %v672, 0
        %v696 = vsel %vm341, %v679, 0
        %v698 = vsel %vm341, %v686, 0
        %v700 = vsel %vm341, %v693, 0
        %702 = vmatpush.msra.mxu0 0.0
        %703 = vmatpush.msra.mxu0 0.0
        %704 = vmatpush.msra.mxu0 0.0
        %705 = vmatpush.msra.mxu0 0.0
        %706 = vmatpush.msra.mxu0 0.0
        %707 = vmatpush.msra.mxu0 0.0
        %708 = vmatpush.msra.mxu0 0.0
        %709 = vmatpush.msra.mxu0 0.0
        %710 = vmatpush.msra.mxu0 0.0
        %711 = vmatpush.msra.mxu0 0.0
        %712 = vmatpush.msra.mxu0 0.0
        %713 = vmatpush.msra.mxu0 0.0
        %714 = vmatpush.msra.mxu0 0.0
        %715 = vmatpush.msra.mxu0 0.0
        %v716 = vand.u32 %v233, 4294901760
        %717 = vmatpush.msra.mxu0 %v716
        %v718 = vand.u32 %v232, 4294901760
        %719 = vmatpush.msra.mxu0 %v718
        %v720 = vand.u32 %v694, 4294901760
        %v721 = vsub.f32 %v694, %v720
        %v722 = vand.u32 %v721, 4294901760
        %v723 = vsub.f32 %v721, %v722
        %v724 = vand.u32 %v723, 4294901760
        %725 = vmatmul.f32.gmra.mxu0 %v724
        %v726 = vpop.f32.mrf.mxu0
        %v727 = vadd.f32 0.0, %v726
        %v728 = vand.u32 %v696, 4294901760
        %v729 = vsub.f32 %v696, %v728
        %v730 = vand.u32 %v729, 4294901760
        %v731 = vsub.f32 %v729, %v730
        %v732 = vand.u32 %v731, 4294901760
        %733 = vmatmul.f32.gmra.mxu0 %v732
        %v734 = vpop.f32.mrf.mxu0
        %v735 = vadd.f32 0.0, %v734
        %v736 = vand.u32 %v698, 4294901760
        %v737 = vsub.f32 %v698, %v736
        %v738 = vand.u32 %v737, 4294901760
        %v739 = vsub.f32 %v737, %v738
        %v740 = vand.u32 %v739, 4294901760
        %741 = vmatmul.f32.gmra.mxu0 %v740
        %v742 = vpop.f32.mrf.mxu0
        %v743 = vadd.f32 0.0, %v742
        %v744 = vand.u32 %v700, 4294901760
        %v745 = vsub.f32 %v700, %v744
        %v746 = vand.u32 %v745, 4294901760
        %v747 = vsub.f32 %v745, %v746
        %v748 = vand.u32 %v747, 4294901760
        %749 = vmatmul.f32.gmra.mxu0 %v748
        %v750 = vpop.f32.mrf.mxu0
        %v751 = vadd.f32 0.0, %v750
        %752 = vdwg.mxu0
        %753 = vmatpush.msra.mxu0 0.0
        %754 = vmatpush.msra.mxu0 0.0
        %755 = vmatpush.msra.mxu0 0.0
        %756 = vmatpush.msra.mxu0 0.0
        %757 = vmatpush.msra.mxu0 0.0
        %758 = vmatpush.msra.mxu0 0.0
        %759 = vmatpush.msra.mxu0 0.0
        %760 = vmatpush.msra.mxu0 0.0
        %761 = vmatpush.msra.mxu0 0.0
        %762 = vmatpush.msra.mxu0 0.0
        %763 = vmatpush.msra.mxu0 0.0
        %764 = vmatpush.msra.mxu0 0.0
        %765 = vmatpush.msra.mxu0 0.0
        %766 = vmatpush.msra.mxu0 0.0
        %v767 = vand.u32 %v233, 4294901760
        %v768 = vsub.f32 %v233, %v767
        %v769 = vand.u32 %v768, 4294901760
        %v770 = vsub.f32 %v768, %v769
        %v771 = vand.u32 %v770, 4294901760
        %772 = vmatpush.msra.mxu0 %v771
        %v773 = vand.u32 %v232, 4294901760
        %v774 = vsub.f32 %v232, %v773
        %v775 = vand.u32 %v774, 4294901760
        %v776 = vsub.f32 %v774, %v775
        %v777 = vand.u32 %v776, 4294901760
        %778 = vmatpush.msra.mxu0 %v777
        %v779 = vand.u32 %v694, 4294901760
        %780 = vmatmul.f32.gmra.mxu0 %v779
        %v781 = vpop.f32.mrf.mxu0
        %v782 = vadd.f32 %v727, %v781
        %v783 = vand.u32 %v696, 4294901760
        %784 = vmatmul.f32.gmra.mxu0 %v783
        %v785 = vpop.f32.mrf.mxu0
        %v786 = vadd.f32 %v735, %v785
        %v787 = vand.u32 %v698, 4294901760
        %788 = vmatmul.f32.gmra.mxu0 %v787
        %v789 = vpop.f32.mrf.mxu0
        %v790 = vadd.f32 %v743, %v789
        %v791 = vand.u32 %v700, 4294901760
        %792 = vmatmul.f32.gmra.mxu0 %v791
        %v793 = vpop.f32.mrf.mxu0
        %v794 = vadd.f32 %v751, %v793
        %795 = vdwg.mxu0
        %796 = vmatpush.msra.mxu0 0.0
        %797 = vmatpush.msra.mxu0 0.0
        %798 = vmatpush.msra.mxu0 0.0
        %799 = vmatpush.msra.mxu0 0.0
        %800 = vmatpush.msra.mxu0 0.0
        %801 = vmatpush.msra.mxu0 0.0
        %802 = vmatpush.msra.mxu0 0.0
        %803 = vmatpush.msra.mxu0 0.0
        %804 = vmatpush.msra.mxu0 0.0
        %805 = vmatpush.msra.mxu0 0.0
        %806 = vmatpush.msra.mxu0 0.0
        %807 = vmatpush.msra.mxu0 0.0
        %808 = vmatpush.msra.mxu0 0.0
        %809 = vmatpush.msra.mxu0 0.0
        %v810 = vand.u32 %v233, 4294901760
        %v811 = vsub.f32 %v233, %v810
        %812 = vmatpush.msra.mxu0 %v811
        %v813 = vand.u32 %v232, 4294901760
        %v814 = vsub.f32 %v232, %v813
        %815 = vmatpush.msra.mxu0 %v814
        %v816 = vand.u32 %v694, 4294901760
        %v817 = vsub.f32 %v694, %v816
        %818 = vmatmul.f32.gmra.mxu0 %v817
        %v819 = vpop.f32.mrf.mxu0
        %v820 = vadd.f32 %v782, %v819
        %v821 = vand.u32 %v696, 4294901760
        %v822 = vsub.f32 %v696, %v821
        %823 = vmatmul.f32.gmra.mxu0 %v822
        %v824 = vpop.f32.mrf.mxu0
        %v825 = vadd.f32 %v786, %v824
        %v826 = vand.u32 %v698, 4294901760
        %v827 = vsub.f32 %v698, %v826
        %828 = vmatmul.f32.gmra.mxu0 %v827
        %v829 = vpop.f32.mrf.mxu0
        %v830 = vadd.f32 %v790, %v829
        %v831 = vand.u32 %v700, 4294901760
        %v832 = vsub.f32 %v700, %v831
        %833 = vmatmul.f32.gmra.mxu0 %v832
        %v834 = vpop.f32.mrf.mxu0
        %v835 = vadd.f32 %v794, %v834
        %836 = vdwg.mxu0
        %837 = vmatpush.msra.mxu0 0.0
        %838 = vmatpush.msra.mxu0 0.0
        %839 = vmatpush.msra.mxu0 0.0
        %840 = vmatpush.msra.mxu0 0.0
        %841 = vmatpush.msra.mxu0 0.0
        %842 = vmatpush.msra.mxu0 0.0
        %843 = vmatpush.msra.mxu0 0.0
        %844 = vmatpush.msra.mxu0 0.0
        %845 = vmatpush.msra.mxu0 0.0
        %846 = vmatpush.msra.mxu0 0.0
        %847 = vmatpush.msra.mxu0 0.0
        %848 = vmatpush.msra.mxu0 0.0
        %849 = vmatpush.msra.mxu0 0.0
        %850 = vmatpush.msra.mxu0 0.0
        %v851 = vand.u32 %v233, 4294901760
        %852 = vmatpush.msra.mxu0 %v851
        %v853 = vand.u32 %v232, 4294901760
        %854 = vmatpush.msra.mxu0 %v853
        %v855 = vand.u32 %v694, 4294901760
        %v856 = vsub.f32 %v694, %v855
        %v857 = vand.u32 %v856, 4294901760
        %858 = vmatmul.f32.gmra.mxu0 %v857
        %v859 = vpop.f32.mrf.mxu0
        %v860 = vadd.f32 %v820, %v859
        %v861 = vand.u32 %v696, 4294901760
        %v862 = vsub.f32 %v696, %v861
        %v863 = vand.u32 %v862, 4294901760
        %864 = vmatmul.f32.gmra.mxu0 %v863
        %v865 = vpop.f32.mrf.mxu0
        %v866 = vadd.f32 %v825, %v865
        %v867 = vand.u32 %v698, 4294901760
        %v868 = vsub.f32 %v698, %v867
        %v869 = vand.u32 %v868, 4294901760
        %870 = vmatmul.f32.gmra.mxu0 %v869
        %v871 = vpop.f32.mrf.mxu0
        %v872 = vadd.f32 %v830, %v871
        %v873 = vand.u32 %v700, 4294901760
        %v874 = vsub.f32 %v700, %v873
        %v875 = vand.u32 %v874, 4294901760
        %876 = vmatmul.f32.gmra.mxu0 %v875
        %v877 = vpop.f32.mrf.mxu0
        %v878 = vadd.f32 %v835, %v877
        %879 = vdwg.mxu0
        %880 = vmatpush.msra.mxu0 0.0
        %881 = vmatpush.msra.mxu0 0.0
        %882 = vmatpush.msra.mxu0 0.0
        %883 = vmatpush.msra.mxu0 0.0
        %884 = vmatpush.msra.mxu0 0.0
        %885 = vmatpush.msra.mxu0 0.0
        %886 = vmatpush.msra.mxu0 0.0
        %887 = vmatpush.msra.mxu0 0.0
        %888 = vmatpush.msra.mxu0 0.0
        %889 = vmatpush.msra.mxu0 0.0
        %890 = vmatpush.msra.mxu0 0.0
        %891 = vmatpush.msra.mxu0 0.0
        %892 = vmatpush.msra.mxu0 0.0
        %893 = vmatpush.msra.mxu0 0.0
        %v894 = vand.u32 %v233, 4294901760
        %v895 = vsub.f32 %v233, %v894
        %v896 = vand.u32 %v895, 4294901760
        %897 = vmatpush.msra.mxu0 %v896
        %v898 = vand.u32 %v232, 4294901760
        %v899 = vsub.f32 %v232, %v898
        %v900 = vand.u32 %v899, 4294901760
        %901 = vmatpush.msra.mxu0 %v900
        %v902 = vand.u32 %v694, 4294901760
        %903 = vmatmul.f32.gmra.mxu0 %v902
        %v904 = vpop.f32.mrf.mxu0
        %v905 = vadd.f32 %v860, %v904
        %v906 = vand.u32 %v696, 4294901760
        %907 = vmatmul.f32.gmra.mxu0 %v906
        %v908 = vpop.f32.mrf.mxu0
        %v909 = vadd.f32 %v866, %v908
        %v910 = vand.u32 %v698, 4294901760
        %911 = vmatmul.f32.gmra.mxu0 %v910
        %v912 = vpop.f32.mrf.mxu0
        %v913 = vadd.f32 %v872, %v912
        %v914 = vand.u32 %v700, 4294901760
        %915 = vmatmul.f32.gmra.mxu0 %v914
        %v916 = vpop.f32.mrf.mxu0
        %v917 = vadd.f32 %v878, %v916
        %918 = vdwg.mxu0
        %919 = vmatpush.msra.mxu0 0.0
        %920 = vmatpush.msra.mxu0 0.0
        %921 = vmatpush.msra.mxu0 0.0
        %922 = vmatpush.msra.mxu0 0.0
        %923 = vmatpush.msra.mxu0 0.0
        %924 = vmatpush.msra.mxu0 0.0
        %925 = vmatpush.msra.mxu0 0.0
        %926 = vmatpush.msra.mxu0 0.0
        %927 = vmatpush.msra.mxu0 0.0
        %928 = vmatpush.msra.mxu0 0.0
        %929 = vmatpush.msra.mxu0 0.0
        %930 = vmatpush.msra.mxu0 0.0
        %931 = vmatpush.msra.mxu0 0.0
        %932 = vmatpush.msra.mxu0 0.0
        %v933 = vand.u32 %v233, 4294901760
        %934 = vmatpush.msra.mxu0 %v933
        %v935 = vand.u32 %v232, 4294901760
        %936 = vmatpush.msra.mxu0 %v935
        %v937 = vand.u32 %v694, 4294901760
        %938 = vmatmul.f32.gmra.mxu0 %v937
        %v939 = vpop.f32.mrf.mxu0
        %v940 = vadd.f32 %v905, %v939
        %v941 = vand.u32 %v696, 4294901760
        %942 = vmatmul.f32.gmra.mxu0 %v941
        %v943 = vpop.f32.mrf.mxu0
        %v944 = vadd.f32 %v909, %v943
        %v945 = vand.u32 %v698, 4294901760
        %946 = vmatmul.f32.gmra.mxu0 %v945
        %v947 = vpop.f32.mrf.mxu0
        %v948 = vadd.f32 %v913, %v947
        %v949 = vand.u32 %v700, 4294901760
        %950 = vmatmul.f32.gmra.mxu0 %v949
        %v951 = vpop.f32.mrf.mxu0
        %v952 = vadd.f32 %v917, %v951
        %953 = vdwg.mxu0
        %s954 = scalar_lea.vmem %s230, 16
        %955 = vst.msk [vmem:[%s954] sm:$0xff] %vm602, %v940
        %957 = vrot.lane.b32.xlu0 %v940, 120
        %v958 = vpop.permute.xlu0 %957
        %s960 = scalar_lea.vmem %s230, 24
        %961 = vst.msk [vmem:[%s960] sm:$0xff] %vm602, %v958
        %s962 = scalar_lea.vmem %s230, 48
        %963 = vst.msk [vmem:[%s962] sm:$0xff] %vm602, %v944
        %965 = vrot.lane.b32.xlu0 %v944, 120
        %v966 = vpop.permute.xlu0 %965
        %s968 = scalar_lea.vmem %s230, 56
        %969 = vst.msk [vmem:[%s968] sm:$0xff] %vm602, %v966
        %s970 = scalar_lea.vmem %s230, 80
        %971 = vst.msk [vmem:[%s970] sm:$0xff] %vm602, %v948
        %973 = vrot.lane.b32.xlu0 %v948, 120
        %v974 = vpop.permute.xlu0 %973
        %s976 = scalar_lea.vmem %s230, 88
        %977 = vst.msk [vmem:[%s976] sm:$0xff] %vm602, %v974
        %s978 = scalar_lea.vmem %s230, 112
        %979 = vst.msk [vmem:[%s978] sm:$0xff] %vm602, %v952
        %981 = vrot.lane.b32.xlu0 %v952, 120
        %v982 = vpop.permute.xlu0 %981
        %s984 = scalar_lea.vmem %s230, 120
        %985 = vst.msk [vmem:[%s984] sm:$0xff] %vm602, %v982
        %s986 = smul.u32 16, %s23
        %p987 = scmp.lt.s32.totalorder %s22, 1
        %s988 = scalar_select %p987, %s22, 1
        %p989 = scmp.lt.s32.totalorder %s986, 15
        %s990 = scalar_select %p989, %s986, 15
        %p991 = scmp.lt.s32.totalorder %s24, 0
        %s992 = scalar_select %p991, %s24, 0
        %s993 = sadd.s32 %s992, %s990
        %s994 = smul.addr %s988, 16
        %s995 = sadd.s32 %s993, %s994
        %s996 = smul.addr %s995, 8
        %s997 = scalar_lea.vmem %s2, %s996
        // Predicated region
        $region37: #{tpu_custom_call.1} parent=27 // pred_check
          %p998 = pneg %p109
        $region38: #{tpu_custom_call.1} parent=27 // pred_check_branch
          %1000 = sbr.rel (%p998) target = $region40
        $region39: #{tpu_custom_call.1} parent=27 // pred_region
          %s1001 = smul.u32 16, %s23
        $region40: #{tpu_custom_call.1} parent=27 // pred_fallthru
          _
      $region28: #{tpu_custom_call.1} parent=5 // pred_fallthru
        _
      %p1002 = scmp.le.s32.totalorder 2, %s12
      // Predicated region
      $region41: #{tpu_custom_call.1} parent=5 // pred_check
        %p1003 = pneg %p1002
      $region42: #{tpu_custom_call.1} parent=5 // pred_check_branch
        %1005 = sbr.rel (%p1003) target = $region44
      $region43: #{tpu_custom_call.1} parent=5 // pred_region
        %s1006 = ssub.s32 %s12, 2
        // Predicated region
        $region45: #{tpu_custom_call.1} parent=43 // pred_check
          %p1007 = pneg %p115
        $region46: #{tpu_custom_call.1} parent=43 // pred_check_branch
          %1009 = sbr.rel (%p1007) target = $region48
        $region47: #{tpu_custom_call.1} parent=43 // pred_region
          %s1010 = smul.u32 16, %s26
          %p1011 = scmp.lt.s32.totalorder %s25, 1
          %s1012 = scalar_select %p1011, %s25, 1
          %p1013 = scmp.lt.s32.totalorder %s1010, 15
          %s1014 = scalar_select %p1013, %s1010, 15
          %p1015 = scmp.lt.s32.totalorder %s27, 0
          %s1016 = scalar_select %p1015, %s27, 0
          %s1017 = sadd.s32 %s1016, %s1014
          %s1018 = smul.addr %s1012, 16
          %s1019 = sadd.s32 %s1017, %s1018
          %s1020 = smul.addr %s1019, 8
          %s1021 = scalar_lea.vmem %s2, %s1020
        $region48: #{tpu_custom_call.1} parent=43 // pred_fallthru
          _
      $region44: #{tpu_custom_call.1} parent=5 // pred_fallthru
        _
    $region6: #{tpu_custom_call.1} parent=1 // loop_footer
      %s16 = sadd.s32 1, %s12
    $region7: #{tpu_custom_call.1} parent=1 // loop_footer_branch
      %11 = sbr.rel target = $region3
    $region8: #{tpu_custom_call.1} parent=1 // loop_exit
      _
    %1022 = vsyncpa [#allocation3], 1
    %s1023 = scalar_lea.sflag [#allocation3], 1
    %1024 = vsyncpa %s1023, 1
    %1025 = vsyncpa [#allocation5], 1

</llo_original>
